<compile_context>
chip_gen: v7x
topology: tpu7x:2x2x1
jax: 0.10.0
libtpu: 0.0.40
codegen_flags: <defaults>
</compile_context>

<pallas_src>
import functools

import jax
import jax.numpy as jnp
from jax.experimental import pallas as pl
from jax.experimental.pallas import tpu as pltpu

BN_EPS = 1e-5


def mlp_head_kernel(x_ref, w1_ref, gamma_ref, beta_ref, w2_ref, b2_ref, o_ref):
    j = pl.program_id(0)

    # ---- Linear 1 on this hidden tile (MXU, bf16 in / f32 acc). No bias:
    # a pre-BN per-feature bias cancels exactly under training-mode BN.
    h = jnp.dot(x_ref[...], w1_ref[...], preferred_element_type=jnp.float32)  # (B, th) f32

    # ---- BatchNorm1d (training mode), single-pass stats + fused affine ----
    inv_n = 1.0 / h.shape[0]
    mean = jnp.sum(h, axis=0, keepdims=True) * inv_n              # (1, th)
    ex2 = jnp.sum(h * h, axis=0, keepdims=True) * inv_n           # (1, th)
    var = jnp.maximum(ex2 - mean * mean, 0.0)                     # biased variance
    scale = gamma_ref[...] * jax.lax.rsqrt(var + BN_EPS)          # (1, th)
    shift = beta_ref[...] - mean * scale                          # (1, th)

    # ---- BN affine + ReLU (2 VPU passes over the [B, th] tile) ----
    h = jnp.maximum(h * scale + shift, 0.0)

    # ---- Linear 2 partial product for this hidden tile (MXU) ----
    partial = jnp.dot(h.astype(jnp.bfloat16), w2_ref[...],
                      preferred_element_type=jnp.float32)          # (B, C_out) f32

    # ---- Accumulate into the resident output block ----
    @pl.when(j == 0)
    def _():
        o_ref[...] = jnp.broadcast_to(b2_ref[...], o_ref.shape)

    o_ref[...] += partial


def mlp_head(x, w1, gamma, beta, w2, b2, *, th=None):
    """Forward pass of MLPHead (training-mode BN).

    x:     [B, C_in]  (any float dtype; cast to bf16 for the MXU)
    w1:    [C_in, H]  (Linear-1 weight, pre-transposed)
    gamma: [H] or [1, H]   BN weight
    beta:  [H] or [1, H]   BN bias
    w2:    [H, C_out] (Linear-2 weight, pre-transposed)
    b2:    [C_out] or [1, C_out]
    Note: Linear-1's bias is NOT an input — it cancels exactly under BN.
    """
    B, C_in = x.shape
    H = w1.shape[1]
    C_out = w2.shape[1]

    if th is None:
        # Hidden-tile size: multiple of 128 lanes when possible; one tile otherwise.
        # (Re-derive the cap per generation: ~512 fits comfortably on v6e,
        #  ~half that budget on v7x's 64 MiB VMEM.)
        th = 512 if H % 512 == 0 else (128 if H % 128 == 0 else H)
    assert H % th == 0, "hidden size must be divisible by the hidden tile"

    # bf16 operands for the matmuls: halves weight DMA/VMEM, full MXU rate
    # on v6e/v7x. BN math stays in f32 inside the kernel.
    x_b = x.astype(jnp.bfloat16)
    w1_b = w1.astype(jnp.bfloat16)
    w2_b = w2.astype(jnp.bfloat16)
    gamma2 = gamma.reshape(1, H).astype(jnp.float32)
    beta2 = beta.reshape(1, H).astype(jnp.float32)
    b2_2 = b2.reshape(1, C_out).astype(jnp.float32)

    grid = (H // th,)
    cost = pl.CostEstimate(
        flops=2 * B * C_in * H + 2 * B * H * C_out,
        transcendentals=0,
        bytes_accessed=(x_b.size + w1_b.size + w2_b.size) * 2
        + (gamma2.size + beta2.size + b2_2.size + B * C_out) * 4,
    )

    return pl.pallas_call(
        mlp_head_kernel,
        out_shape=jax.ShapeDtypeStruct((B, C_out), jnp.float32),
        grid_spec=pltpu.PrefetchScalarGridSpec(
            num_scalar_prefetch=0,
            grid=grid,
            in_specs=[
                pl.BlockSpec((B, C_in), lambda j: (0, 0)),     # x (resident)
                pl.BlockSpec((C_in, th), lambda j: (0, j)),    # w1 hidden tile
                pl.BlockSpec((1, th), lambda j: (0, j)),       # gamma tile
                pl.BlockSpec((1, th), lambda j: (0, j)),       # beta tile
                pl.BlockSpec((th, C_out), lambda j: (j, 0)),   # w2 hidden tile
                pl.BlockSpec((1, C_out), lambda j: (0, 0)),    # b2 (resident)
            ],
            out_specs=pl.BlockSpec((B, C_out), lambda j: (0, 0)),  # accumulator
        ),
        compiler_params=pltpu.CompilerParams(
            dimension_semantics=("arbitrary",),   # reduction over hidden tiles
        ),
        cost_estimate=cost,
    )(x_b, w1_b, gamma2, beta2, w2_b, b2_2)


def init_params(key, in_channels, hidden_size, out_size):
    """Deterministic init mirroring PyTorch defaults for nn.Linear / nn.BatchNorm1d."""
    k1, k2, k3, k4 = jax.random.split(key, 4)
    bound1 = 1.0 / jnp.sqrt(in_channels)
    bound2 = 1.0 / jnp.sqrt(hidden_size)
    # Linear weights stored already transposed: [in, out].
    w1 = jax.random.uniform(k1, (in_channels, hidden_size), jnp.float32, -bound1, bound1)
    b1 = jax.random.uniform(k2, (1, hidden_size), jnp.float32, -bound1, bound1)
    gamma = jnp.ones((1, hidden_size), jnp.float32)   # BN weight = 1
    beta = jnp.zeros((1, hidden_size), jnp.float32)   # BN bias = 0
    w2 = jax.random.uniform(k3, (hidden_size, out_size), jnp.float32, -bound2, bound2)
    b2 = jax.random.uniform(k4, (1, out_size), jnp.float32, -bound2, bound2)
    return w1, b1, gamma, beta, w2, b2


def mlp_head_ref(x, w1, b1, gamma, beta, w2, b2):
    """Pure-JAX reference mirroring PyTorch training-mode BN semantics.

    Includes the Linear-1 bias (the kernel drops it — it cancels exactly under
    BN) and uses the same bf16-input / f32-accumulate matmul precision as the
    kernel so the comparison is tight.
    """
    h = jnp.dot(x.astype(jnp.bfloat16), w1.astype(jnp.bfloat16),
                preferred_element_type=jnp.float32) + b1
    mean = jnp.mean(h, axis=0, keepdims=True)
    var = jnp.mean((h - mean) ** 2, axis=0, keepdims=True)   # biased variance
    h = (h - mean) * jax.lax.rsqrt(var + BN_EPS) * gamma + beta
    h = jnp.maximum(h, 0.0)
    return jnp.dot(h.astype(jnp.bfloat16), w2.astype(jnp.bfloat16),
                   preferred_element_type=jnp.float32) + b2


if __name__ == "__main__":
    # Small but hardware-aligned shapes: batch=16, in=128, hidden=256, out=128.
    # hidden=256 with th=128 exercises the 2-step accumulator grid; out=128
    # keeps output stores lane-dense.
    batch, in_channels, hidden_size, out_size = 16, 128, 256, 128

    key = jax.random.PRNGKey(0)
    kx, kp = jax.random.split(key)
    x = jax.random.normal(kx, (batch, in_channels), dtype=jnp.float32)
    w1, b1, gamma, beta, w2, b2 = init_params(kp, in_channels, hidden_size, out_size)

    run = jax.jit(functools.partial(mlp_head, th=128))
    out = run(x, w1, gamma, beta, w2, b2)
    out = jax.block_until_ready(out)

    ref = mlp_head_ref(x, w1, b1, gamma, beta, w2, b2)
    assert out.shape == (batch, out_size)
    assert jnp.allclose(out, ref, atol=1e-3, rtol=1e-3), "mismatch vs reference"

    print("KERNEL_OK")
</pallas_src>

<mosaic_0001>
module attributes {stable_mosaic.version = 11 : i64} {
  func.func @mlp_head_kernel(%arg0: i32, %arg1: memref<16x128xbf16, #tpu.memory_space<vmem>>, %arg2: memref<128x128xbf16, #tpu.memory_space<vmem>>, %arg3: memref<1x128xf32, #tpu.memory_space<vmem>>, %arg4: memref<1x128xf32, #tpu.memory_space<vmem>>, %arg5: memref<128x128xbf16, #tpu.memory_space<vmem>>, %arg6: memref<1x128xf32, #tpu.memory_space<vmem>>, %arg7: memref<16x128xf32, #tpu.memory_space<vmem>>) attributes {dimension_semantics = [#tpu.dimension_semantics<arbitrary>], iteration_bounds = array<i64: 2>, scalar_prefetch = 0 : i64, scratch_operands = 0 : i64, tpu.core_type = #tpu.core_type<tc>, window_params = [{pipeline_mode = #tpu.pipeline_mode<synchronous>, transform_indices = @transform_0, window_bounds = array<i64: 16, 128>}, {transform_indices = @transform_1, window_bounds = array<i64: 128, 128>}, {transform_indices = @transform_2, window_bounds = array<i64: 1, 128>}, {transform_indices = @transform_3, window_bounds = array<i64: 1, 128>}, {transform_indices = @transform_4, window_bounds = array<i64: 128, 128>}, {pipeline_mode = #tpu.pipeline_mode<synchronous>, transform_indices = @transform_5, window_bounds = array<i64: 1, 128>}, {pipeline_mode = #tpu.pipeline_mode<synchronous>, transform_indices = @transform_6, window_bounds = array<i64: 16, 128>}]} {
    %c0 = arith.constant 0 : index
    %c0_0 = arith.constant 0 : index
    %0 = vector.load %arg1[%c0, %c0_0] : memref<16x128xbf16, #tpu.memory_space<vmem>>, vector<16x128xbf16>
    %c0_1 = arith.constant 0 : index
    %c0_2 = arith.constant 0 : index
    %1 = vector.load %arg2[%c0_1, %c0_2] : memref<128x128xbf16, #tpu.memory_space<vmem>>, vector<128x128xbf16>
    %cst = arith.constant dense<0.000000e+00> : vector<16x128xf32>
    %2 = tpu.matmul %0, %1, %cst {dimension_numbers = #tpu.dot_dimension_numbers<[1], [0], [0], [1], [0, 0, 1, 1], [], []>} : vector<16x128xbf16>, vector<128x128xbf16>, vector<16x128xf32> -> vector<16x128xf32>
    %cst_3 = arith.constant dense<0.000000e+00> : vector<128xf32>
    %3 = vector.multi_reduction <add>, %2, %cst_3 [0] : vector<16x128xf32> to vector<128xf32>
    %4 = vector.shape_cast %3 : vector<128xf32> to vector<1x128xf32>
    %cst_4 = arith.constant 6.250000e-02 : f32
    %5 = vector.broadcast %cst_4 : f32 to vector<1x128xf32>
    %6 = arith.mulf %4, %5 : vector<1x128xf32>
    %7 = arith.mulf %2, %2 : vector<16x128xf32>
    %cst_5 = arith.constant dense<0.000000e+00> : vector<128xf32>
    %8 = vector.multi_reduction <add>, %7, %cst_5 [0] : vector<16x128xf32> to vector<128xf32>
    %9 = vector.shape_cast %8 : vector<128xf32> to vector<1x128xf32>
    %cst_6 = arith.constant 6.250000e-02 : f32
    %10 = vector.broadcast %cst_6 : f32 to vector<1x128xf32>
    %11 = arith.mulf %9, %10 : vector<1x128xf32>
    %12 = arith.mulf %6, %6 : vector<1x128xf32>
    %13 = arith.subf %11, %12 : vector<1x128xf32>
    %cst_7 = arith.constant 0.000000e+00 : f32
    %14 = vector.broadcast %cst_7 : f32 to vector<1x128xf32>
    %15 = arith.maximumf %13, %14 : vector<1x128xf32>
    %c0_8 = arith.constant 0 : index
    %c0_9 = arith.constant 0 : index
    %16 = vector.load %arg3[%c0_8, %c0_9] : memref<1x128xf32, #tpu.memory_space<vmem>>, vector<1x128xf32>
    %cst_10 = arith.constant 9.99999974E-6 : f32
    %17 = vector.broadcast %cst_10 : f32 to vector<1x128xf32>
    %18 = arith.addf %15, %17 : vector<1x128xf32>
    %19 = math.rsqrt %18 : vector<1x128xf32>
    %20 = arith.mulf %16, %19 : vector<1x128xf32>
    %c0_11 = arith.constant 0 : index
    %c0_12 = arith.constant 0 : index
    %21 = vector.load %arg4[%c0_11, %c0_12] : memref<1x128xf32, #tpu.memory_space<vmem>>, vector<1x128xf32>
    %22 = arith.mulf %6, %20 : vector<1x128xf32>
    %23 = arith.subf %21, %22 : vector<1x128xf32>
    %24 = vector.broadcast %20 : vector<1x128xf32> to vector<16x128xf32>
    %25 = arith.mulf %2, %24 : vector<16x128xf32>
    %26 = vector.broadcast %23 : vector<1x128xf32> to vector<16x128xf32>
    %27 = arith.addf %25, %26 : vector<16x128xf32>
    %cst_13 = arith.constant 0.000000e+00 : f32
    %28 = vector.broadcast %cst_13 : f32 to vector<16x128xf32>
    %29 = arith.maximumf %27, %28 : vector<16x128xf32>
    %30 = arith.truncf %29 : vector<16x128xf32> to vector<16x128xbf16>
    %c0_14 = arith.constant 0 : index
    %c0_15 = arith.constant 0 : index
    %31 = vector.load %arg5[%c0_14, %c0_15] : memref<128x128xbf16, #tpu.memory_space<vmem>>, vector<128x128xbf16>
    %cst_16 = arith.constant dense<0.000000e+00> : vector<16x128xf32>
    %32 = tpu.matmul %30, %31, %cst_16 {dimension_numbers = #tpu.dot_dimension_numbers<[1], [0], [0], [1], [0, 0, 1, 1], [], []>} : vector<16x128xbf16>, vector<128x128xbf16>, vector<16x128xf32> -> vector<16x128xf32>
    %c0_i32 = arith.constant 0 : i32
    %33 = arith.cmpi eq, %arg0, %c0_i32 : i32
    %34 = arith.extui %33 : i1 to i32
    %c0_i32_17 = arith.constant 0 : i32
    %35 = arith.cmpi ne, %34, %c0_i32_17 : i32
    scf.if %35 {
      %c0_22 = arith.constant 0 : index
      %c0_23 = arith.constant 0 : index
      %39 = vector.load %arg6[%c0_22, %c0_23] : memref<1x128xf32, #tpu.memory_space<vmem>>, vector<1x128xf32>
      %40 = vector.shape_cast %39 : vector<1x128xf32> to vector<1x128xf32>
      %41 = vector.broadcast %40 : vector<1x128xf32> to vector<16x128xf32>
      %c0_24 = arith.constant 0 : index
      %c0_25 = arith.constant 0 : index
      %42 = vector.load %arg7[%c0_24, %c0_25] : memref<16x128xf32, #tpu.memory_space<vmem>>, vector<16x128xf32>
      tpu.vector_store %arg7[%c0_24, %c0_25], %41 {strides = array<i32>} : memref<16x128xf32, #tpu.memory_space<vmem>>, vector<16x128xf32>,
    } else {
    }
    %c0_18 = arith.constant 0 : index
    %c0_19 = arith.constant 0 : index
    %36 = vector.load %arg7[%c0_18, %c0_19] : memref<16x128xf32, #tpu.memory_space<vmem>>, vector<16x128xf32>
    %37 = arith.addf %36, %32 : vector<16x128xf32>
    %c0_20 = arith.constant 0 : index
    %c0_21 = arith.constant 0 : index
    %38 = vector.load %arg7[%c0_20, %c0_21] : memref<16x128xf32, #tpu.memory_space<vmem>>, vector<16x128xf32>
    tpu.vector_store %arg7[%c0_20, %c0_21], %37 {strides = array<i32>} : memref<16x128xf32, #tpu.memory_space<vmem>>, vector<16x128xf32>,
    return
  }
  func.func @transform_0(%arg0: i32) -> (i32, i32) {
    %c0_i32 = arith.constant 0 : i32
    %c0_i32_0 = arith.constant 0 : i32
    %c0_i32_1 = arith.constant 0 : i32
    return %c0_i32, %c0_i32_0 : i32, i32
  }
  func.func @transform_1(%arg0: i32) -> (i32, i32) {
    %c0_i32 = arith.constant 0 : i32
    %c0_i32_0 = arith.constant 0 : i32
    return %c0_i32, %arg0 : i32, i32
  }
  func.func @transform_2(%arg0: i32) -> (i32, i32) {
    %c0_i32 = arith.constant 0 : i32
    %c0_i32_0 = arith.constant 0 : i32
    return %c0_i32, %arg0 : i32, i32
  }
  func.func @transform_3(%arg0: i32) -> (i32, i32) {
    %c0_i32 = arith.constant 0 : i32
    %c0_i32_0 = arith.constant 0 : i32
    return %c0_i32, %arg0 : i32, i32
  }
  func.func @transform_4(%arg0: i32) -> (i32, i32) {
    %c0_i32 = arith.constant 0 : i32
    %c0_i32_0 = arith.constant 0 : i32
    return %arg0, %c0_i32 : i32, i32
  }
  func.func @transform_5(%arg0: i32) -> (i32, i32) {
    %c0_i32 = arith.constant 0 : i32
    %c0_i32_0 = arith.constant 0 : i32
    %c0_i32_1 = arith.constant 0 : i32
    return %c0_i32, %c0_i32_0 : i32, i32
  }
  func.func @transform_6(%arg0: i32) -> (i32, i32) {
    %c0_i32 = arith.constant 0 : i32
    %c0_i32_0 = arith.constant 0 : i32
    %c0_i32_1 = arith.constant 0 : i32
    return %c0_i32, %c0_i32_0 : i32, i32
  }
}

</mosaic_0001>

<llo_original>
// kernel: mlp_head.1
$region0: #{mlp_head.1}
  #allocation0 [shape = 'u32[]', space=smem, size = 0x4, offset = 0x4, fixed_abs, tag = 'smem constant byte address 0x4 - core index']
  #allocation1 [shape = 'u32[144,128]{1,0:T(1,128)}', space=vmem, size = 0x12000, scoped, tag = 'internal scratch']
  %s0 = inlined_call_operand.vmem [shape: bf16[16,128], index: 0, kind: input, shape index: {}]
  %s1 = inlined_call_operand.vmem [shape: bf16[128,256], index: 1, kind: input, shape index: {}]
  %s2 = inlined_call_operand.vmem [shape: f32[1,256], index: 2, kind: input, shape index: {}]
  %s3 = inlined_call_operand.vmem [shape: f32[1,256], index: 3, kind: input, shape index: {}]
  %s4 = inlined_call_operand.vmem [shape: bf16[256,128], index: 4, kind: input, shape index: {}]
  %s5 = inlined_call_operand.vmem [shape: f32[1,128], index: 5, kind: input, shape index: {}]
  %s6 = inlined_call_operand.hbm [shape: f32[16,128], index: 6, kind: output, shape index: {}]
  %s7 = sld [smem:[#allocation0]]
  $region102: #{mlp_head.1} parent=0
    _
  %s9 = ssub.s32 1, %s7
  %s10 = scalar_select 0, %s9, %s7
  $region1: #{mlp_head.1} parent=0
    #allocation2 [shape = 'u8[65536]{0}', space=vmem, size = 0x10000, scoped, tag = 'input window, operand 1']
    #allocation3 [shape = 'u8[8192]{0}', space=vmem, size = 0x2000, scoped, tag = 'output window, operand 0, single buffered']
    #allocation4 [shape = 's32[2]{0}', space=sflag, size = 0x8, scoped, tag = 'scoped memory for mlp_head.1']
    %11 = vsyncpa [#allocation4], 0
    loop: start=0, step=1, limit=4
    $region2: #{mlp_head.1} parent=1 // loop_pre_header
      _
    $region3: #{mlp_head.1} parent=1 // loop_header
      %s13 = sphi 0, %s17
      %p14 = scmp.ge.s32.totalorder %s13, 4
      %s21 = sphi 0, %s21
      %s23 = sphi 0, %s21
      %s24 = sphi 0, %s23
      %s38 = sphi 0, %s24
      %s44 = sphi 0, %s46
      %s47 = sphi 0, %s44
      %s48 = sphi 0, %s47
      %s64 = sphi 0, %s48
      %s70 = sphi 0, %s72
      %s73 = sphi 0, %s70
      %s74 = sphi 0, %s73
      %s90 = sphi 0, %s74
      %s96 = sphi 0, %s98
      %s99 = sphi 0, %s96
      %s100 = sphi 0, %s99
      %s116 = sphi 0, %s100
      %s122 = sphi 0, %s124
      %s125 = sphi 0, %s122
      %s126 = sphi 0, %s125
      %s142 = sphi 0, %s126
      %s146 = sphi 0, %s146
      %s148 = sphi 0, %s146
      %s149 = sphi 0, %s148
      %s163 = sphi 0, %s149
      %s167 = sphi 0, %s167
      %s169 = sphi 0, %s167
      %s170 = sphi 0, %s169
      %s184 = sphi 0, %s170
    $region4: #{mlp_head.1} parent=1 // loop_header_branch
      %16 = sbr.rel (%p14) target = $region8
    $region5: #{mlp_head.1} parent=1 // loop_body
      %s18 = ssub.s32 %s13, 1
      %s19 = ssub.s32 %s13, 2
      %s20 = sadd.s32 %s13, 1
      %s22 = sadd.s32 %s21, 1
      %p25 = scmp.eq.s32.totalorder %s13, 1
      %p26 = scmp.ne.s32.totalorder %s21, %s23
      %p27 = scmp.eq.s32.totalorder %s13, 0
      %p28 = por %p26, %p27
      %p29 = scmp.ne.s32.totalorder %s21, %s23
      %p30 = scmp.eq.s32.totalorder %s18, 1
      %p31 = por %p29, %p30
      %p32 = scmp.ne.s32.totalorder %s23, %s24
      %p33 = scmp.eq.s32.totalorder %s18, 0
      %p34 = por %p32, %p33
      %p35 = scmp.ne.s32.totalorder %s23, %s24
      %p36 = scmp.eq.s32.totalorder %s19, 1
      %p37 = por %p35, %p36
      %p39 = scmp.ne.s32.totalorder %s24, %s38
      %p40 = scmp.eq.s32.totalorder %s19, 0
      %p41 = por %p39, %p40
      %s42 = ssub.s32 %s13, %s20
      %p43 = scmp.eq.s32.totalorder %s42, 0
      %s45 = sadd.s32 %s44, 1
      %s46 = scalar_select %p43, %s44, %s45
      %p49 = pneg %p43
      %p50 = scmp.eq.s32.totalorder %s13, 1
      %p51 = por %p49, %p50
      %p52 = scmp.ne.s32.totalorder %s44, %s47
      %p53 = scmp.eq.s32.totalorder %s13, 0
      %p54 = por %p52, %p53
      %p55 = scmp.ne.s32.totalorder %s44, %s47
      %p56 = scmp.eq.s32.totalorder %s18, 1
      %p57 = por %p55, %p56
      %p58 = scmp.ne.s32.totalorder %s47, %s48
      %p59 = scmp.eq.s32.totalorder %s18, 0
      %p60 = por %p58, %p59
      %p61 = scmp.ne.s32.totalorder %s47, %s48
      %p62 = scmp.eq.s32.totalorder %s19, 1
      %p63 = por %p61, %p62
      %p65 = scmp.ne.s32.totalorder %s48, %s64
      %p66 = scmp.eq.s32.totalorder %s19, 0
      %p67 = por %p65, %p66
      %s68 = ssub.s32 %s13, %s20
      %p69 = scmp.eq.s32.totalorder %s68, 0
      %s71 = sadd.s32 %s70, 1
      %s72 = scalar_select %p69, %s70, %s71
      %p75 = pneg %p69
      %p76 = scmp.eq.s32.totalorder %s13, 1
      %p77 = por %p75, %p76
      %p78 = scmp.ne.s32.totalorder %s70, %s73
      %p79 = scmp.eq.s32.totalorder %s13, 0
      %p80 = por %p78, %p79
      %p81 = scmp.ne.s32.totalorder %s70, %s73
      %p82 = scmp.eq.s32.totalorder %s18, 1
      %p83 = por %p81, %p82
      %p84 = scmp.ne.s32.totalorder %s73, %s74
      %p85 = scmp.eq.s32.totalorder %s18, 0
      %p86 = por %p84, %p85
      %p87 = scmp.ne.s32.totalorder %s73, %s74
      %p88 = scmp.eq.s32.totalorder %s19, 1
      %p89 = por %p87, %p88
      %p91 = scmp.ne.s32.totalorder %s74, %s90
      %p92 = scmp.eq.s32.totalorder %s19, 0
      %p93 = por %p91, %p92
      %s94 = ssub.s32 %s13, %s20
      %p95 = scmp.eq.s32.totalorder %s94, 0
      %s97 = sadd.s32 %s96, 1
      %s98 = scalar_select %p95, %s96, %s97
      %p101 = pneg %p95
      %p102 = scmp.eq.s32.totalorder %s13, 1
      %p103 = por %p101, %p102
      %p104 = scmp.ne.s32.totalorder %s96, %s99
      %p105 = scmp.eq.s32.totalorder %s13, 0
      %p106 = por %p104, %p105
      %p107 = scmp.ne.s32.totalorder %s96, %s99
      %p108 = scmp.eq.s32.totalorder %s18, 1
      %p109 = por %p107, %p108
      %p110 = scmp.ne.s32.totalorder %s99, %s100
      %p111 = scmp.eq.s32.totalorder %s18, 0
      %p112 = por %p110, %p111
      %p113 = scmp.ne.s32.totalorder %s99, %s100
      %p114 = scmp.eq.s32.totalorder %s19, 1
      %p115 = por %p113, %p114
      %p117 = scmp.ne.s32.totalorder %s100, %s116
      %p118 = scmp.eq.s32.totalorder %s19, 0
      %p119 = por %p117, %p118
      %s120 = ssub.s32 %s13, %s20
      %p121 = scmp.eq.s32.totalorder %s120, 0
      %s123 = sadd.s32 %s122, 1
      %s124 = scalar_select %p121, %s122, %s123
      %p127 = pneg %p121
      %p128 = scmp.eq.s32.totalorder %s13, 1
      %p129 = por %p127, %p128
      %p130 = scmp.ne.s32.totalorder %s122, %s125
      %p131 = scmp.eq.s32.totalorder %s13, 0
      %p132 = por %p130, %p131
      %p133 = scmp.ne.s32.totalorder %s122, %s125
      %p134 = scmp.eq.s32.totalorder %s18, 1
      %p135 = por %p133, %p134
      %p136 = scmp.ne.s32.totalorder %s125, %s126
      %p137 = scmp.eq.s32.totalorder %s18, 0
      %p138 = por %p136, %p137
      %p139 = scmp.ne.s32.totalorder %s125, %s126
      %p140 = scmp.eq.s32.totalorder %s19, 1
      %p141 = por %p139, %p140
      %p143 = scmp.ne.s32.totalorder %s126, %s142
      %p144 = scmp.eq.s32.totalorder %s19, 0
      %p145 = por %p143, %p144
      %s147 = sadd.s32 %s146, 1
      %p150 = scmp.eq.s32.totalorder %s13, 1
      %p151 = scmp.ne.s32.totalorder %s146, %s148
      %p152 = scmp.eq.s32.totalorder %s13, 0
      %p153 = por %p151, %p152
      %p154 = scmp.ne.s32.totalorder %s146, %s148
      %p155 = scmp.eq.s32.totalorder %s18, 1
      %p156 = por %p154, %p155
      %p157 = scmp.ne.s32.totalorder %s148, %s149
      %p158 = scmp.eq.s32.totalorder %s18, 0
      %p159 = por %p157, %p158
      %p160 = scmp.ne.s32.totalorder %s148, %s149
      %p161 = scmp.eq.s32.totalorder %s19, 1
      %p162 = por %p160, %p161
      %p164 = scmp.ne.s32.totalorder %s149, %s163
      %p165 = scmp.eq.s32.totalorder %s19, 0
      %p166 = por %p164, %p165
      %s168 = sadd.s32 %s167, 1
      %p171 = scmp.eq.s32.totalorder %s13, 1
      %p172 = scmp.ne.s32.totalorder %s167, %s169
      %p173 = scmp.eq.s32.totalorder %s13, 0
      %p174 = por %p172, %p173
      %p175 = scmp.ne.s32.totalorder %s167, %s169
      %p176 = scmp.eq.s32.totalorder %s18, 1
      %p177 = por %p175, %p176
      %p178 = scmp.ne.s32.totalorder %s169, %s170
      %p179 = scmp.eq.s32.totalorder %s18, 0
      %p180 = por %p178, %p179
      %p181 = scmp.ne.s32.totalorder %s169, %s170
      %p182 = scmp.eq.s32.totalorder %s19, 1
      %p183 = por %p181, %p182
      %p185 = scmp.ne.s32.totalorder %s170, %s184
      %p186 = scmp.eq.s32.totalorder %s19, 0
      %p187 = por %p185, %p186
      %p188 = scmp.le.s32.totalorder 1, %s13
      %p189 = scmp.lt.s32.totalorder %s13, 3
      %p190 = pnand %p188, %p189
      %p191 = pneg %p190
      // Predicated region
      $region9: #{mlp_head.1} parent=5 // pred_check
        _
      $region10: #{mlp_head.1} parent=5 // pred_check_branch
        %193 = sbr.rel (%p190) target = $region12
      $region11: #{mlp_head.1} parent=5 // pred_region
        %s194 = ssub.s32 %s13, 1
        // Predicated region
        $region13: #{mlp_head.1} parent=11 // pred_check
          %p195 = pneg %p34
        $region14: #{mlp_head.1} parent=11 // pred_check_branch
          %197 = sbr.rel (%p195) target = $region16
        $region15: #{mlp_head.1} parent=11 // pred_region
          _
        $region16: #{mlp_head.1} parent=11 // pred_fallthru
          _
        // Predicated region
        $region17: #{mlp_head.1} parent=11 // pred_check
          %p198 = pneg %p159
        $region18: #{mlp_head.1} parent=11 // pred_check_branch
          %200 = sbr.rel (%p198) target = $region20
        $region19: #{mlp_head.1} parent=11 // pred_region
          _
        $region20: #{mlp_head.1} parent=11 // pred_fallthru
          _
      $region12: #{mlp_head.1} parent=5 // pred_fallthru
        _
      %p201 = scmp.lt.s32.totalorder %s13, 2
      // Predicated region
      $region21: #{mlp_head.1} parent=5 // pred_check
        %p202 = pneg %p201
      $region22: #{mlp_head.1} parent=5 // pred_check_branch
        %204 = sbr.rel (%p202) target = $region24
      $region23: #{mlp_head.1} parent=5 // pred_region
        // Predicated region
        $region25: #{mlp_head.1} parent=23 // pred_check
          %p205 = pneg %p54
        $region26: #{mlp_head.1} parent=23 // pred_check_branch
          %207 = sbr.rel (%p205) target = $region28
        $region27: #{mlp_head.1} parent=23 // pred_region
          %s208 = sand.u32 %s44, 1
          %s209 = sand.u32 %s44, 1
          %s210 = smul.addr %s209, 64
          %s211 = scalar_lea.vmem [#allocation2], %s210
          %s212 = smul.addr %s13, 4
          %s213 = scalar_lea.vmem %s1, %s212
          // Predicated region
          $region29: #{mlp_head.1} parent=27 // pred_check
            _
          $region30: #{mlp_head.1} parent=27 // pred_check_branch
            %215 = sbr.rel (0) target = $region32
          $region31: #{mlp_head.1} parent=27 // pred_region
            // Predicated region
            $region33: #{mlp_head.1} parent=31 // pred_check
              _
            $region34: #{mlp_head.1} parent=31 // pred_check_branch
              %217 = sbr.rel target = $region36
            $region35: #{mlp_head.1} parent=31 // pred_region
              // Predicated region
              $region48: #{mlp_head.1} parent=35 // pred_check
                _
              $region49: #{mlp_head.1} parent=35 // pred_check_branch
                %262 = sbr.rel (0) target = $region51
              $region50: #{mlp_head.1} parent=35 // pred_region
                loop: start=0, step=1, limit=1
                $region52: #{mlp_head.1} parent=50 // loop_pre_header
                  _
                $region53: #{mlp_head.1} parent=50 // loop_header
                  %s264 = sphi 0, %s268
                  %p265 = scmp.ge.s32.totalorder %s264, 1
                  %s269 = sphi %s213, %s213
                  %s270 = sphi %s211, %s211
                $region54: #{mlp_head.1} parent=50 // loop_header_branch
                  %267 = sbr.rel (%p265) target = $region58
                $region55: #{mlp_head.1} parent=50 // loop_body
                  _
                $region56: #{mlp_head.1} parent=50 // loop_footer
                  %s268 = sadd.s32 1, %s264
                $region57: #{mlp_head.1} parent=50 // loop_footer_branch
                  %263 = sbr.rel target = $region53
                $region58: #{mlp_head.1} parent=50 // loop_exit
                  _
                loop: start=0, step=1, limit=1
                $region59: #{mlp_head.1} parent=50 // loop_pre_header
                  _
                $region60: #{mlp_head.1} parent=50 // loop_header
                  %s273 = sphi 0, %s277
                  %p274 = scmp.ge.s32.totalorder %s273, 1
                  %s278 = sphi %s213, %s213
                  %s279 = sphi %s211, %s211
                $region61: #{mlp_head.1} parent=50 // loop_header_branch
                  %276 = sbr.rel (%p274) target = $region65
                $region62: #{mlp_head.1} parent=50 // loop_body
                  %v280 = vld [vmem:[%s278] sm:$0xf]
                  %281 = vst [vmem:[%s279] sm:$0xf] %v280
                  %v282 = vld [vmem:[%s278 + $0x8] sm:$0xf]
                  %283 = vst [vmem:[%s279 + $0x4] sm:$0xf] %v282
                  %v284 = vld [vmem:[%s278 + $0x10] sm:$0xf]
                  %285 = vst [vmem:[%s279 + $0x8] sm:$0xf] %v284
                  %v286 = vld [vmem:[%s278 + $0x18] sm:$0xf]
                  %287 = vst [vmem:[%s279 + $0xc] sm:$0xf] %v286
                  %v288 = vld [vmem:[%s278 + $0x20] sm:$0xf]
                  %289 = vst [vmem:[%s279 + $0x10] sm:$0xf] %v288
                  %v290 = vld [vmem:[%s278 + $0x28] sm:$0xf]
                  %291 = vst [vmem:[%s279 + $0x14] sm:$0xf] %v290
                  %v292 = vld [vmem:[%s278 + $0x30] sm:$0xf]
                  %293 = vst [vmem:[%s279 + $0x18] sm:$0xf] %v292
                  %v294 = vld [vmem:[%s278 + $0x38] sm:$0xf]
                  %295 = vst [vmem:[%s279 + $0x1c] sm:$0xf] %v294
                  %v296 = vld [vmem:[%s278 + $0x40] sm:$0xf]
                  %297 = vst [vmem:[%s279 + $0x20] sm:$0xf] %v296
                  %v298 = vld [vmem:[%s278 + $0x48] sm:$0xf]
                  %299 = vst [vmem:[%s279 + $0x24] sm:$0xf] %v298
                  %v300 = vld [vmem:[%s278 + $0x50] sm:$0xf]
                  %301 = vst [vmem:[%s279 + $0x28] sm:$0xf] %v300
                  %v302 = vld [vmem:[%s278 + $0x58] sm:$0xf]
                  %303 = vst [vmem:[%s279 + $0x2c] sm:$0xf] %v302
                  %v304 = vld [vmem:[%s278 + $0x60] sm:$0xf]
                  %305 = vst [vmem:[%s279 + $0x30] sm:$0xf] %v304
                  %v306 = vld [vmem:[%s278 + $0x68] sm:$0xf]
                  %307 = vst [vmem:[%s279 + $0x34] sm:$0xf] %v306
                  %v308 = vld [vmem:[%s278 + $0x70] sm:$0xf]
                  %309 = vst [vmem:[%s279 + $0x38] sm:$0xf] %v308
                  %v310 = vld [vmem:[%s278 + $0x78] sm:$0xf]
                  %311 = vst [vmem:[%s279 + $0x3c] sm:$0xf] %v310
                $region63: #{mlp_head.1} parent=50 // loop_footer
                  %s277 = sadd.s32 1, %s273
                $region64: #{mlp_head.1} parent=50 // loop_footer_branch
                  %272 = sbr.rel target = $region60
                $region65: #{mlp_head.1} parent=50 // loop_exit
                  _
              $region51: #{mlp_head.1} parent=35 // pred_fallthru
                _
            $region36: #{mlp_head.1} parent=31 // pred_fallthru
              _
            // Predicated region
            $region37: #{mlp_head.1} parent=31 // pred_check
              _
            $region38: #{mlp_head.1} parent=31 // pred_check_branch
              %219 = sbr.rel (0) target = $region40
            $region39: #{mlp_head.1} parent=31 // pred_region
              loop: start=0, step=1, limit=1
              $region41: #{mlp_head.1} parent=39 // loop_pre_header
                _
              $region42: #{mlp_head.1} parent=39 // loop_header
                %s222 = sphi 0, %s226
                %p223 = scmp.ge.s32.totalorder %s222, 1
                %s227 = sphi %s213, %s213
                %s228 = sphi %s211, %s211
              $region43: #{mlp_head.1} parent=39 // loop_header_branch
                %225 = sbr.rel (%p223) target = $region47
              $region44: #{mlp_head.1} parent=39 // loop_body
                %v229 = vld [vmem:[%s227] sm:$0xf]
                %230 = vst [vmem:[%s228] sm:$0xf] %v229
                %v231 = vld [vmem:[%s227 + $0x8] sm:$0xf]
                %232 = vst [vmem:[%s228 + $0x4] sm:$0xf] %v231
                %v233 = vld [vmem:[%s227 + $0x10] sm:$0xf]
                %234 = vst [vmem:[%s228 + $0x8] sm:$0xf] %v233
                %v235 = vld [vmem:[%s227 + $0x18] sm:$0xf]
                %236 = vst [vmem:[%s228 + $0xc] sm:$0xf] %v235
                %v237 = vld [vmem:[%s227 + $0x20] sm:$0xf]
                %238 = vst [vmem:[%s228 + $0x10] sm:$0xf] %v237
                %v239 = vld [vmem:[%s227 + $0x28] sm:$0xf]
                %240 = vst [vmem:[%s228 + $0x14] sm:$0xf] %v239
                %v241 = vld [vmem:[%s227 + $0x30] sm:$0xf]
                %242 = vst [vmem:[%s228 + $0x18] sm:$0xf] %v241
                %v243 = vld [vmem:[%s227 + $0x38] sm:$0xf]
                %244 = vst [vmem:[%s228 + $0x1c] sm:$0xf] %v243
                %v245 = vld [vmem:[%s227 + $0x40] sm:$0xf]
                %246 = vst [vmem:[%s228 + $0x20] sm:$0xf] %v245
                %v247 = vld [vmem:[%s227 + $0x48] sm:$0xf]
                %248 = vst [vmem:[%s228 + $0x24] sm:$0xf] %v247
                %v249 = vld [vmem:[%s227 + $0x50] sm:$0xf]
                %250 = vst [vmem:[%s228 + $0x28] sm:$0xf] %v249
                %v251 = vld [vmem:[%s227 + $0x58] sm:$0xf]
                %252 = vst [vmem:[%s228 + $0x2c] sm:$0xf] %v251
                %v253 = vld [vmem:[%s227 + $0x60] sm:$0xf]
                %254 = vst [vmem:[%s228 + $0x30] sm:$0xf] %v253
                %v255 = vld [vmem:[%s227 + $0x68] sm:$0xf]
                %256 = vst [vmem:[%s228 + $0x34] sm:$0xf] %v255
                %v257 = vld [vmem:[%s227 + $0x70] sm:$0xf]
                %258 = vst [vmem:[%s228 + $0x38] sm:$0xf] %v257
                %v259 = vld [vmem:[%s227 + $0x78] sm:$0xf]
                %260 = vst [vmem:[%s228 + $0x3c] sm:$0xf] %v259
              $region45: #{mlp_head.1} parent=39 // loop_footer
                %s226 = sadd.s32 1, %s222
              $region46: #{mlp_head.1} parent=39 // loop_footer_branch
                %221 = sbr.rel target = $region42
              $region47: #{mlp_head.1} parent=39 // loop_exit
                _
            $region40: #{mlp_head.1} parent=31 // pred_fallthru
              _
          $region32: #{mlp_head.1} parent=27 // pred_fallthru
            _
          %312 = vnop
        $region28: #{mlp_head.1} parent=23 // pred_fallthru
          _
        // Predicated region
        $region66: #{mlp_head.1} parent=23 // pred_check
          %p313 = pneg %p80
        $region67: #{mlp_head.1} parent=23 // pred_check_branch
          %315 = sbr.rel (%p313) target = $region69
        $region68: #{mlp_head.1} parent=23 // pred_region
          %p316 = scmp.lt.s32.totalorder %s13, 1
          %s317 = scalar_select %p316, %s13, 1
          %s318 = scalar_lea.vmem %s2, %s317
        $region69: #{mlp_head.1} parent=23 // pred_fallthru
          _
        // Predicated region
        $region70: #{mlp_head.1} parent=23 // pred_check
          %p319 = pneg %p106
        $region71: #{mlp_head.1} parent=23 // pred_check_branch
          %321 = sbr.rel (%p319) target = $region73
        $region72: #{mlp_head.1} parent=23 // pred_region
          %p322 = scmp.lt.s32.totalorder %s13, 1
          %s323 = scalar_select %p322, %s13, 1
          %s324 = scalar_lea.vmem %s3, %s323
        $region73: #{mlp_head.1} parent=23 // pred_fallthru
          _
        // Predicated region
        $region74: #{mlp_head.1} parent=23 // pred_check
          %p325 = pneg %p132
        $region75: #{mlp_head.1} parent=23 // pred_check_branch
          %327 = sbr.rel (%p325) target = $region77
        $region76: #{mlp_head.1} parent=23 // pred_region
          %s328 = smul.u32 16, %s13
          %p329 = scmp.lt.s32.totalorder %s328, 31
          %s330 = scalar_select %p329, %s328, 31
          %s331 = smul.addr %s330, 4
          %s332 = scalar_lea.vmem %s4, %s331
          %s333 = smul.u32 16, %s13
        $region77: #{mlp_head.1} parent=23 // pred_fallthru
          _
      $region24: #{mlp_head.1} parent=5 // pred_fallthru
        _
      %p334 = scmp.le.s32.totalorder 1, %s13
      %p335 = scmp.lt.s32.totalorder %s13, 3
      %p336 = pnand %p334, %p335
      %p337 = pneg %p336
      // Predicated region
      $region78: #{mlp_head.1} parent=5 // pred_check
        _
      $region79: #{mlp_head.1} parent=5 // pred_check_branch
        %339 = sbr.rel (%p336) target = $region81
      $region80: #{mlp_head.1} parent=5 // pred_region
        %s340 = ssub.s32 %s13, 1
        %s341 = sand.u32 %s47, 1
        %s342 = sand.u32 %s47, 1
        %s343 = smul.addr %s342, 64
        %s344 = scalar_lea.vmem [#allocation2], %s343
        // Predicated region
        $region82: #{mlp_head.1} parent=80 // pred_check
          %p345 = pneg %p60
        $region83: #{mlp_head.1} parent=80 // pred_check_branch
          %347 = sbr.rel (%p345) target = $region85
        $region84: #{mlp_head.1} parent=80 // pred_region
          _
        $region85: #{mlp_head.1} parent=80 // pred_fallthru
          _
        %p348 = pneg %p34
        %p349 = pneg %p31
        %s350 = sand.u32 %s47, 1
        %s351 = sand.u32 %s47, 1
        %s352 = smul.addr %s351, 64
        %s353 = scalar_lea.vmem [#allocation2], %s352
        %p354 = pneg %p60
        %p355 = pneg %p57
        %p356 = scmp.lt.s32.totalorder %s18, 1
        %s357 = scalar_select %p356, %s18, 1
        %s358 = scalar_lea.vmem %s2, %s357
        %p359 = pneg %p86
        %p360 = pneg %p83
        %p361 = scmp.lt.s32.totalorder %s18, 1
        %s362 = scalar_select %p361, %s18, 1
        %s363 = scalar_lea.vmem %s3, %s362
        %p364 = pneg %p112
        %p365 = pneg %p109
        %s366 = smul.u32 16, %s18
        %p367 = scmp.lt.s32.totalorder %s366, 31
        %s368 = scalar_select %p367, %s366, 31
        %s369 = smul.addr %s368, 4
        %s370 = scalar_lea.vmem %s4, %s369
        %p371 = pneg %p138
        %p372 = pneg %p135
        %p373 = pneg %p159
        %p374 = pneg %p156
        %p375 = pneg %p180
        %p376 = pneg %p177
        %p377 = scmp.lt.s32.totalorder %s18, 1
        %s378 = scalar_select %p377, %s18, 1
        %s379 = scalar_lea.vmem %s2, %s378
        %p380 = scmp.lt.s32.totalorder %s18, 1
        %s381 = scalar_select %p380, %s18, 1
        %s382 = scalar_lea.vmem %s3, %s381
        %s383 = smul.u32 16, %s18
        %p384 = scmp.lt.s32.totalorder %s383, 31
        %s385 = scalar_select %p384, %s383, 31
        %s386 = smul.addr %s385, 4
        %s387 = scalar_lea.vmem %s4, %s386
        %s388 = smul.u32 16, %s18
        %v390 = vld [vmem:[%s0] sm:$0xf]
        %v391 = vld [vmem:[%s0 + $0x4] sm:$0xf]
        %v392 = vld [vmem:[%s344] sm:$0xf]
        %v393 = vld [vmem:[%s344 + $0x4] sm:$0xf]
        %v394 = vld [vmem:[%s344 + $0x8] sm:$0xf]
        %v395 = vld [vmem:[%s344 + $0xc] sm:$0xf]
        %v396 = vld [vmem:[%s344 + $0x10] sm:$0xf]
        %v397 = vld [vmem:[%s344 + $0x14] sm:$0xf]
        %v398 = vld [vmem:[%s344 + $0x18] sm:$0xf]
        %v399 = vld [vmem:[%s344 + $0x1c] sm:$0xf]
        %v400 = vld [vmem:[%s344 + $0x20] sm:$0xf]
        %v401 = vld [vmem:[%s344 + $0x24] sm:$0xf]
        %v402 = vld [vmem:[%s344 + $0x28] sm:$0xf]
        %v403 = vld [vmem:[%s344 + $0x2c] sm:$0xf]
        %v404 = vld [vmem:[%s344 + $0x30] sm:$0xf]
        %v405 = vld [vmem:[%s344 + $0x34] sm:$0xf]
        %v406 = vld [vmem:[%s344 + $0x38] sm:$0xf]
        %v407 = vld [vmem:[%s344 + $0x3c] sm:$0xf]
        %v410 = vunpack.c.l.b16 %v390
        %v411 = vunpack.c.l.b16 %v391
        %v412 = vpack.c.b16 %v411, %v410
        %v430 = vunpack.c.l.b16 %v392
        %v431 = vunpack.c.l.b16 %v393
        %v432 = vunpack.c.l.b16 %v394
        %v433 = vunpack.c.l.b16 %v395
        %v434 = vunpack.c.l.b16 %v396
        %v435 = vunpack.c.l.b16 %v397
        %v436 = vunpack.c.l.b16 %v398
        %v437 = vunpack.c.l.b16 %v399
        %v438 = vunpack.c.l.b16 %v400
        %v439 = vunpack.c.l.b16 %v401
        %v440 = vunpack.c.l.b16 %v402
        %v441 = vunpack.c.l.b16 %v403
        %v442 = vunpack.c.l.b16 %v404
        %v443 = vunpack.c.l.b16 %v405
        %v444 = vunpack.c.l.b16 %v406
        %v445 = vunpack.c.l.b16 %v407
        %v446 = vpack.c.b16 %v431, %v430
        %v447 = vpack.c.b16 %v433, %v432
        %v448 = vpack.c.b16 %v435, %v434
        %v449 = vpack.c.b16 %v437, %v436
        %v450 = vpack.c.b16 %v439, %v438
        %v451 = vpack.c.b16 %v441, %v440
        %v452 = vpack.c.b16 %v443, %v442
        %v453 = vpack.c.b16 %v445, %v444
        %462 = vmatprep.subr.bf16.mxu0 0
        %463 = vmatpush1.bf16.msra.mxu0 %v446
        %464 = vmatprep.subr.bf16.mxu0 0
        %465 = vmatpush1.bf16.msra.mxu0 %v447
        %466 = vmatprep.subr.bf16.mxu0 0
        %467 = vmatpush1.bf16.msra.mxu0 %v448
        %468 = vmatprep.subr.bf16.mxu0 0
        %469 = vmatpush1.bf16.msra.mxu0 %v449
        %470 = vmatprep.subr.bf16.mxu0 0
        %471 = vmatpush1.bf16.msra.mxu0 %v450
        %472 = vmatprep.subr.bf16.mxu0 0
        %473 = vmatpush1.bf16.msra.mxu0 %v451
        %474 = vmatprep.subr.bf16.mxu0 0
        %475 = vmatpush1.bf16.msra.mxu0 %v452
        %476 = vmatprep.subr.bf16.mxu0 0
        %477 = vmatpush1.bf16.msra.mxu0 %v453
        %478 = vmatprep.subr.bf16.mxu0 0
        %479 = vmatpush1.bf16.msra.mxu0 0
        %480 = vmatprep.subr.bf16.mxu0 0
        %481 = vmatpush1.bf16.msra.mxu0 0
        %482 = vmatprep.subr.bf16.mxu0 0
        %483 = vmatpush1.bf16.msra.mxu0 0
        %484 = vmatprep.subr.bf16.mxu0 0
        %485 = vmatpush1.bf16.msra.mxu0 0
        %486 = vmatprep.subr.bf16.mxu0 0
        %487 = vmatpush1.bf16.msra.mxu0 0
        %488 = vmatprep.subr.bf16.mxu0 0
        %489 = vmatpush1.bf16.msra.mxu0 0
        %490 = vmatprep.subr.bf16.mxu0 0
        %491 = vmatpush1.bf16.msra.mxu0 0
        %492 = vmatprep.subr.bf16.mxu0 0
        %493 = vmatpush1.bf16.msra.mxu0 0
        %494 = vmatprep.mubr.bf16.mxu0 0
        %495 = vmatmul.mubr.bf16.gmra.mrb[0].mxu0 %v412
        %v496 = vpop.f32.mrb[0].mxu0
        %v497 = vadd.f32 0.0, %v496
        %v498 = vpop.f32.mrb[0].mxu0
        %v499 = vpop.f32.mrb[0].mxu0
        %v500 = vadd.f32 0.0, %v499
        %v501 = vpop.f32.mrb[0].mxu0
        %502 = vdwg.mxu0
        %v503 = vadd.f32 %v497, %v500
        %v504 = vrot.slane %v503, 4
        %v505 = vadd.f32 %v503, %v504
        %v506 = vrot.slane %v505, 2
        %v507 = vadd.f32 %v505, %v506
        %v508 = vrot.slane %v507, 1
        %v509 = vadd.f32 %v507, %v508
        %v510 = vmul.f32 %v509, 0.0625
        %v511 = vmul.f32 %v497, %v497
        %v512 = vmul.f32 %v500, %v500
        %v513 = vadd.f32 %v511, %v512
        %v514 = vrot.slane %v513, 4
        %v515 = vadd.f32 %v513, %v514
        %v516 = vrot.slane %v515, 2
        %v517 = vadd.f32 %v515, %v516
        %v518 = vrot.slane %v517, 1
        %v519 = vadd.f32 %v517, %v518
        %v520 = vmul.f32 %v519, 0.0625
        %v521 = vmul.f32 %v510, %v510
        %v522 = vsub.f32 %v520, %v521
        %v523 = vmax.f32 %v522, 0.0
        %v524 = vld [vmem:[%s379] sm:$0x1]
        %v525 = vadd.f32 %v523, 1e-05
        %v526 = vrsqrt.pop %v525
        %v527 = vmul.f32 %v524, %v526
        %v528 = vld [vmem:[%s382] sm:$0x1]
        %v529 = vmul.f32 %v510, %v527
        %v530 = vsub.f32 %v528, %v529
        %v532 = vlaneseq
        %v533 = vshrl.u32 %v532, 7
        %v534 = vsub.s32 0, %v533
        %v535 = vrot.slane %v527, %v534
        %v537 = vmul.f32 %v497, %v535
        %v538 = vmul.f32 %v500, %v535
        %v540 = vlaneseq
        %v541 = vshrl.u32 %v540, 7
        %v542 = vsub.s32 0, %v541
        %v543 = vrot.slane %v530, %v542
        %v545 = vadd.f32 %v537, %v543
        %v546 = vadd.f32 %v538, %v543
        %v547 = vmax.f32 %v545, 0.0
        %v548 = vmax.f32 %v546, 0.0
        %v549 = vpack.c.bf16 %v548, %v547
        %v550 = vld [vmem:[%s387] sm:$0xf]
        %v551 = vld [vmem:[%s387 + $0x4] sm:$0xf]
        %v552 = vld [vmem:[%s387 + $0x8] sm:$0xf]
        %v553 = vld [vmem:[%s387 + $0xc] sm:$0xf]
        %v554 = vld [vmem:[%s387 + $0x10] sm:$0xf]
        %v555 = vld [vmem:[%s387 + $0x14] sm:$0xf]
        %v556 = vld [vmem:[%s387 + $0x18] sm:$0xf]
        %v557 = vld [vmem:[%s387 + $0x1c] sm:$0xf]
        %v558 = vld [vmem:[%s387 + $0x20] sm:$0xf]
        %v559 = vld [vmem:[%s387 + $0x24] sm:$0xf]
        %v560 = vld [vmem:[%s387 + $0x28] sm:$0xf]
        %v561 = vld [vmem:[%s387 + $0x2c] sm:$0xf]
        %v562 = vld [vmem:[%s387 + $0x30] sm:$0xf]
        %v563 = vld [vmem:[%s387 + $0x34] sm:$0xf]
        %v564 = vld [vmem:[%s387 + $0x38] sm:$0xf]
        %v565 = vld [vmem:[%s387 + $0x3c] sm:$0xf]
        %v582 = vunpack.c.l.b16 %v550
        %v583 = vunpack.c.l.b16 %v551
        %v584 = vunpack.c.l.b16 %v552
        %v585 = vunpack.c.l.b16 %v553
        %v586 = vunpack.c.l.b16 %v554
        %v587 = vunpack.c.l.b16 %v555
        %v588 = vunpack.c.l.b16 %v556
        %v589 = vunpack.c.l.b16 %v557
        %v590 = vunpack.c.l.b16 %v558
        %v591 = vunpack.c.l.b16 %v559
        %v592 = vunpack.c.l.b16 %v560
        %v593 = vunpack.c.l.b16 %v561
        %v594 = vunpack.c.l.b16 %v562
        %v595 = vunpack.c.l.b16 %v563
        %v596 = vunpack.c.l.b16 %v564
        %v597 = vunpack.c.l.b16 %v565
        %v598 = vpack.c.b16 %v583, %v582
        %v599 = vpack.c.b16 %v585, %v584
        %v600 = vpack.c.b16 %v587, %v586
        %v601 = vpack.c.b16 %v589, %v588
        %v602 = vpack.c.b16 %v591, %v590
        %v603 = vpack.c.b16 %v593, %v592
        %v604 = vpack.c.b16 %v595, %v594
        %v605 = vpack.c.b16 %v597, %v596
        %614 = vmatprep.subr.bf16.mxu0 0
        %615 = vmatpush1.bf16.msra.mxu0 %v598
        %616 = vmatprep.subr.bf16.mxu0 0
        %617 = vmatpush1.bf16.msra.mxu0 %v599
        %618 = vmatprep.subr.bf16.mxu0 0
        %619 = vmatpush1.bf16.msra.mxu0 %v600
        %620 = vmatprep.subr.bf16.mxu0 0
        %621 = vmatpush1.bf16.msra.mxu0 %v601
        %622 = vmatprep.subr.bf16.mxu0 0
        %623 = vmatpush1.bf16.msra.mxu0 %v602
        %624 = vmatprep.subr.bf16.mxu0 0
        %625 = vmatpush1.bf16.msra.mxu0 %v603
        %626 = vmatprep.subr.bf16.mxu0 0
        %627 = vmatpush1.bf16.msra.mxu0 %v604
        %628 = vmatprep.subr.bf16.mxu0 0
        %629 = vmatpush1.bf16.msra.mxu0 %v605
        %630 = vmatprep.subr.bf16.mxu0 0
        %631 = vmatpush1.bf16.msra.mxu0 0
        %632 = vmatprep.subr.bf16.mxu0 0
        %633 = vmatpush1.bf16.msra.mxu0 0
        %634 = vmatprep.subr.bf16.mxu0 0
        %635 = vmatpush1.bf16.msra.mxu0 0
        %636 = vmatprep.subr.bf16.mxu0 0
        %637 = vmatpush1.bf16.msra.mxu0 0
        %638 = vmatprep.subr.bf16.mxu0 0
        %639 = vmatpush1.bf16.msra.mxu0 0
        %640 = vmatprep.subr.bf16.mxu0 0
        %641 = vmatpush1.bf16.msra.mxu0 0
        %642 = vmatprep.subr.bf16.mxu0 0
        %643 = vmatpush1.bf16.msra.mxu0 0
        %644 = vmatprep.subr.bf16.mxu0 0
        %645 = vmatpush1.bf16.msra.mxu0 0
        %646 = vmatprep.mubr.bf16.mxu0 0
        %647 = vmatmul.mubr.bf16.gmra.mrb[0].mxu0 %v549
        %v648 = vpop.f32.mrb[0].mxu0
        %v649 = vadd.f32 0.0, %v648
        %v650 = vpop.f32.mrb[0].mxu0
        %v651 = vpop.f32.mrb[0].mxu0
        %v652 = vadd.f32 0.0, %v651
        %v653 = vpop.f32.mrb[0].mxu0
        %654 = vdwg.mxu0
        %p655 = scmp.eq.s32.totalorder %s18, 0
        // Predicated region
        $region86: #{mlp_head.1} parent=80 // pred_check
          %p656 = pneg %p655
        $region87: #{mlp_head.1} parent=80 // pred_check_branch
          %658 = sbr.rel (%p656) target = $region89
        $region88: #{mlp_head.1} parent=80 // pred_region
          %v659 = vld [vmem:[%s5] sm:$0x1]
          %v661 = vlaneseq
          %v662 = vshrl.u32 %v661, 7
          %v663 = vsub.s32 0, %v662
          %v664 = vrot.slane %v659, %v663
          %666 = vst [vmem:[#allocation3] sm:$0xff] %v664
          %667 = vst [vmem:[#allocation3 + $0x8] sm:$0xff] %v664
        $region89: #{mlp_head.1} parent=80 // pred_fallthru
          _
        %v668 = vld [vmem:[#allocation3] sm:$0xff]
        %v669 = vld [vmem:[#allocation3 + $0x8] sm:$0xff]
        %v670 = vadd.f32 %v668, %v649
        %v671 = vadd.f32 %v669, %v652
        %672 = vst [vmem:[#allocation3] sm:$0xff] %v670
        %673 = vst [vmem:[#allocation3 + $0x8] sm:$0xff] %v671
        // Predicated region
        $region90: #{mlp_head.1} parent=80 // pred_check
          %p674 = pneg %p177
        $region91: #{mlp_head.1} parent=80 // pred_check_branch
          %676 = sbr.rel (%p674) target = $region93
        $region92: #{mlp_head.1} parent=80 // pred_region
          %s678 = ssub.s32 256, 256
          %679 = vsyncadd [#allocation4], %s678
          %s680 = sshll.u32 [#allocation3], 4
          %s681 = int_to_ptr.vmem [resolvable:$true] %s680
          %686 = dma.vmem_to_hbm [thread:$0]  %s681, 256, %s6, [#allocation4], 128, 128, 8
        $region93: #{mlp_head.1} parent=80 // pred_fallthru
          _
        // Predicated region
        $region94: #{mlp_head.1} parent=80 // pred_check
          %p687 = pneg %p177
        $region95: #{mlp_head.1} parent=80 // pred_check_branch
          %689 = sbr.rel (%p687) target = $region97
        $region96: #{mlp_head.1} parent=80 // pred_region
          %690 = dma.done [#allocation4], 256
        $region97: #{mlp_head.1} parent=80 // pred_fallthru
          _
      $region81: #{mlp_head.1} parent=5 // pred_fallthru
        _
      %p691 = scmp.le.s32.totalorder 2, %s13
      // Predicated region
      $region98: #{mlp_head.1} parent=5 // pred_check
        %p692 = pneg %p691
      $region99: #{mlp_head.1} parent=5 // pred_check_branch
        %694 = sbr.rel (%p692) target = $region101
      $region100: #{mlp_head.1} parent=5 // pred_region
        %s695 = ssub.s32 %s13, 2
      $region101: #{mlp_head.1} parent=5 // pred_fallthru
        _
    $region6: #{mlp_head.1} parent=1 // loop_footer
      %s17 = sadd.s32 1, %s13
    $region7: #{mlp_head.1} parent=1 // loop_footer_branch
      %12 = sbr.rel target = $region3
    $region8: #{mlp_head.1} parent=1 // loop_exit
      _
    %696 = vsyncpa [#allocation4], 1
    %s697 = scalar_lea.sflag [#allocation4], 1
    %698 = vsyncpa %s697, 1

</llo_original>
